<compile_context>
chip_gen: v5e
topology: v5e:2x2
jax: 0.10.0
libtpu: 0.0.40
codegen_flags: <defaults>
</compile_context>

<pallas_src>
import functools

import jax
import jax.numpy as jnp
from jax.experimental import pallas as pl
from jax.experimental.pallas import tpu as pltpu

_MIB = 1024 * 1024


def _round_up(x, m):
    return (x + m - 1) // m * m


def _sublane(dtype):
    # sublane packing multiple: 8 for 32-bit, 16 for 16-bit, 32 for 8-bit
    return max(8, 32 // jnp.dtype(dtype).itemsize)


def _vmem_capacity_bytes():
    try:
        return int(pltpu.get_tpu_info().vmem_capacity_bytes)
    except Exception:
        return 64 * _MIB  # conservative fallback: v7x per-TensorCore VMEM


def _conv_bn_relu_kernel(w_ref, shift_ref, x_ref, o_ref):
    # w_ref:     (C_out, C_in)  BN-scale-folded 1x1 conv weight (resident, single-buffered)
    # shift_ref: (C_out, 1)     folded conv-bias + BN shift (f32, resident)
    # x_ref:     (1, C_in, T)   lane-dense tile of one image's flattened H*W
    # o_ref:     (1, C_out, T)  lane-dense output tile
    y = jnp.dot(w_ref[...], x_ref[0], preferred_element_type=jnp.float32)
    y = y + shift_ref[...]
    o_ref[0] = jnp.maximum(y, 0.0).astype(o_ref.dtype)


def _conv_bn_relu_smallhw_kernel(bn, w_ref, shift_ref, x_ref, o_ref):
    # Small-HW path: x_ref (bn, C_in, HW), o_ref (bn, C_out, HW), HW < 128.
    # Several images per block amortize the per-grid-step overhead; partial
    # trailing blocks are masked on writeback by Pallas.
    w = w_ref[...]
    shift = shift_ref[...]
    for i in range(bn):  # bn is a small static Python int
        y = jnp.dot(w, x_ref[i], preferred_element_type=jnp.float32)
        o_ref[i] = jnp.maximum(y + shift, 0.0).astype(o_ref.dtype)


def before_pooling_dim_reduce(x_nchw, w, b, gamma, beta, running_mean,
                              running_var, eps=1e-5, *, tile_hw=None,
                              vmem_fraction=0.70):
    """Fused 1x1 Conv2d -> BatchNorm2d (inference) -> ReLU.

    x_nchw: (N, C_in, H, W); w: (C_out, C_in, 1, 1); b/gamma/beta/mean/var: (C_out,).
    Compute runs in x.dtype (hand over bf16 to halve HBM traffic), accumulation
    in f32, output in x.dtype.
    """
    N, C_in, H, W = x_nchw.shape
    C_out = w.shape[0]
    HW = H * W
    act_dtype = jnp.dtype(x_nchw.dtype)
    out_dtype = act_dtype
    bpe = act_dtype.itemsize

    # Fold conv bias + inference BatchNorm into the weight and a per-channel shift.
    w_mat = w.reshape(C_out, C_in).astype(jnp.float32)
    inv_std = gamma.astype(jnp.float32) / jnp.sqrt(running_var.astype(jnp.float32) + eps)
    w_scaled = (w_mat * inv_std[:, None]).astype(act_dtype)                   # (C_out, C_in)
    shift = ((b.astype(jnp.float32) - running_mean.astype(jnp.float32)) * inv_std
             + beta.astype(jnp.float32)).reshape(C_out, 1)                    # f32 (C_out, 1)

    # NCHW -> (N, C_in, HW): pure reshape, no transpose, no extra HBM pass.
    x_flat = x_nchw.reshape(N, C_in, HW)

    # ---- VMEM accounting (padded to (sublane, 128) layout) -------------------
    cap_total = _vmem_capacity_bytes()
    budget = int(cap_total * vmem_fraction)

    sub = _sublane(act_dtype)
    w_bytes = _round_up(C_out, sub) * _round_up(C_in, 128) * bpe   # single buffer (Buffered(1))
    shift_bytes = _round_up(C_out, 8) * 128 * 4                    # single buffer (Buffered(1))
    resident = w_bytes + shift_bytes

    per_lane_in = _round_up(C_in, sub) * bpe     # x bytes per lane column
    per_lane_out = _round_up(C_out, sub) * bpe   # out bytes per lane column
    avail = budget - resident

    if HW >= 128:
        # ---- main path: lane axis = H*W -------------------------------------
        if tile_hw is None:
            max_tile = (avail // (2 * (per_lane_in + per_lane_out))) // 128 * 128
            if max_tile < 128:
                # TODO(synk): add a K (C_in) grid axis with an f32 VMEM accumulator
                # for very wide layers whose weight leaves no room for a 128-lane tile.
                raise ValueError(
                    f"weight ({C_out}x{C_in}, {w_bytes / _MIB:.1f} MiB) leaves no VMEM "
                    "for a 128-lane tile; channel (K) tiling not implemented.")
            tile_hw = min(max_tile, 4096, _round_up(HW, 128))
        tile_hw = int(min(_round_up(tile_hw, 128), _round_up(HW, 128)))

        # v7x megacore: ensure >= 2 parallel grid steps when possible.
        if N * pl.cdiv(HW, tile_hw) < 2 and HW > 128:
            tile_hw = _round_up(pl.cdiv(HW, 2), 128)

        grid = (N, pl.cdiv(HW, tile_hw))
        footprint = resident + 2 * tile_hw * (per_lane_in + per_lane_out)
        vmem_limit = int(min(max(footprint + 4 * _MIB, 16 * _MIB), cap_total))

        out = pl.pallas_call(
            _conv_bn_relu_kernel,
            out_shape=jax.ShapeDtypeStruct((N, C_out, HW), out_dtype),
            grid=grid,
            in_specs=[
                pl.BlockSpec((C_out, C_in), lambda n, j: (0, 0),
                             pipeline_mode=pl.Buffered(1)),
                pl.BlockSpec((C_out, 1), lambda n, j: (0, 0),
                             pipeline_mode=pl.Buffered(1)),
                pl.BlockSpec((1, C_in, tile_hw), lambda n, j: (n, 0, j)),
            ],
            out_specs=pl.BlockSpec((1, C_out, tile_hw), lambda n, j: (n, 0, j)),
            compiler_params=pltpu.CompilerParams(
                dimension_semantics=("parallel", "parallel"),
                vmem_limit_bytes=vmem_limit,
            ),
        )(w_scaled, shift, x_flat)
    else:
        # ---- small-HW path: full-HW blocks, several images per grid step -----
        per_img = 128 * (per_lane_in + per_lane_out)  # HW pads to one 128-lane block
        bn = max(1, avail // (2 * per_img))
        bn = int(min(bn, N, 16))
        if N >= 2:
            bn = min(bn, pl.cdiv(N, 2))  # keep >= 2 grid steps for v7x megacore
        bn = max(1, bn)
        footprint = resident + 2 * bn * per_img
        if footprint > budget:
            # TODO(synk): K-tiled fallback for very wide layers.
            raise ValueError(
                f"weight ({C_out}x{C_in}) + minimal tile exceeds VMEM budget "
                f"({footprint / _MIB:.1f} MiB > {budget / _MIB:.1f} MiB).")
        grid = (pl.cdiv(N, bn),)
        vmem_limit = int(min(max(footprint + 4 * _MIB, 16 * _MIB), cap_total))

        out = pl.pallas_call(
            functools.partial(_conv_bn_relu_smallhw_kernel, bn),
            out_shape=jax.ShapeDtypeStruct((N, C_out, HW), out_dtype),
            grid=grid,
            in_specs=[
                pl.BlockSpec((C_out, C_in), lambda i: (0, 0),
                             pipeline_mode=pl.Buffered(1)),
                pl.BlockSpec((C_out, 1), lambda i: (0, 0),
                             pipeline_mode=pl.Buffered(1)),
                pl.BlockSpec((bn, C_in, HW), lambda i: (i, 0, 0)),
            ],
            out_specs=pl.BlockSpec((bn, C_out, HW), lambda i: (i, 0, 0)),
            compiler_params=pltpu.CompilerParams(
                dimension_semantics=("parallel",),
                vmem_limit_bytes=vmem_limit,
            ),
        )(w_scaled, shift, x_flat)

    # (N, C_out, HW) -> NCHW: pure reshape, no transpose.
    return out.reshape(N, C_out, H, W)


def init_params(key, input_dim, output_dim):
    """Deterministic init matching the PyTorch module's _init_params."""
    kw, _ = jax.random.split(key)
    # kaiming_normal_(mode='fan_out', nonlinearity='relu'): fan_out = output_dim (1x1 conv)
    std = (2.0 / output_dim) ** 0.5
    w = jax.random.normal(kw, (output_dim, input_dim, 1, 1), jnp.float32) * std
    b = jnp.zeros((output_dim,), jnp.float32)
    gamma = jnp.ones((output_dim,), jnp.float32)
    beta = jnp.zeros((output_dim,), jnp.float32)
    running_mean = jnp.zeros((output_dim,), jnp.float32)
    running_var = jnp.ones((output_dim,), jnp.float32)
    return w, b, gamma, beta, running_mean, running_var


def _reference(x, w, b, gamma, beta, rm, rv, eps=1e-5):
    C_out, C_in = w.shape[0], w.shape[1]
    conv = jnp.einsum("oi,nihw->nohw", w.reshape(C_out, C_in).astype(jnp.float32),
                      x.astype(jnp.float32), precision=jax.lax.Precision.HIGHEST)
    conv = conv + b[None, :, None, None]
    inv_std = gamma / jnp.sqrt(rv + eps)
    y = (conv - rm[None, :, None, None]) * inv_std[None, :, None, None] \
        + beta[None, :, None, None]
    return jnp.maximum(y, 0.0)


if __name__ == "__main__":
    key = jax.random.PRNGKey(0)
    k_x, k_p = jax.random.split(key)

    N, C_in, H, W = 2, 4, 16, 16
    C_out = 8

    x = jax.random.normal(k_x, (N, C_in, H, W), jnp.float32)
    params = init_params(k_p, C_in, C_out)

    fwd = jax.jit(before_pooling_dim_reduce)

    # f32 main path (HW = 256 >= 128)
    y = jax.block_until_ready(fwd(x, *params))
    ref = _reference(x, *params)
    assert y.shape == (N, C_out, H, W)
    assert jnp.allclose(y, ref, atol=1e-4, rtol=1e-4), float(jnp.max(jnp.abs(y - ref)))

    # bf16 end-to-end path (producer hands over bf16; no wrapper-side cast pass)
    y_bf16 = jax.block_until_ready(fwd(x.astype(jnp.bfloat16), *params))
    assert y_bf16.dtype == jnp.bfloat16
    assert jnp.allclose(y_bf16.astype(jnp.float32), ref, atol=5e-2, rtol=5e-2), \
        float(jnp.max(jnp.abs(y_bf16.astype(jnp.float32) - ref)))

    # Small-HW path (7x7 "before pooling" maps): batched-images blocks
    Ns, Hs, Ws = 3, 7, 7
    xs = jax.random.normal(k_x, (Ns, C_in, Hs, Ws), jnp.float32)
    ys = jax.block_until_ready(fwd(xs, *params))
    refs = _reference(xs, *params)
    assert ys.shape == (Ns, C_out, Hs, Ws)
    assert jnp.allclose(ys, refs, atol=1e-4, rtol=1e-4), float(jnp.max(jnp.abs(ys - refs)))

    print("KERNEL_OK")
</pallas_src>

<mosaic_0001>
module attributes {stable_mosaic.version = 11 : i64} {
  func.func @_conv_bn_relu_kernel(%arg0: i32, %arg1: i32, %arg2: memref<8x4xf32, #tpu.memory_space<vmem>>, %arg3: memref<8x1xf32, #tpu.memory_space<vmem>>, %arg4: memref<1x4x256xf32, #tpu.memory_space<vmem>>, %arg5: memref<1x8x256xf32, #tpu.memory_space<vmem>>) attributes {dimension_semantics = [#tpu.dimension_semantics<parallel>, #tpu.dimension_semantics<parallel>], iteration_bounds = array<i64: 2, 1>, scalar_prefetch = 0 : i64, scratch_operands = 0 : i64, tpu.core_type = #tpu.core_type<tc>, window_params = [{pipeline_mode = #tpu.pipeline_mode<synchronous>, transform_indices = @transform_0, window_bounds = array<i64: 8, 4>}, {pipeline_mode = #tpu.pipeline_mode<synchronous>, transform_indices = @transform_1, window_bounds = array<i64: 8, 1>}, {transform_indices = @transform_2, window_bounds = array<i64: 1, 4, 256>}, {transform_indices = @transform_3, window_bounds = array<i64: 1, 8, 256>}]} {
    %c0 = arith.constant 0 : index
    %c0_0 = arith.constant 0 : index
    %0 = vector.load %arg2[%c0, %c0_0] : memref<8x4xf32, #tpu.memory_space<vmem>>, vector<8x4xf32>
    %c0_1 = arith.constant 0 : index
    %c0_2 = arith.constant 0 : index
    %c0_3 = arith.constant 0 : index
    %1 = vector.load %arg4[%c0_1, %c0_2, %c0_3] : memref<1x4x256xf32, #tpu.memory_space<vmem>>, vector<1x4x256xf32>
    %2 = vector.shape_cast %1 : vector<1x4x256xf32> to vector<4x256xf32>
    %cst = arith.constant dense<0.000000e+00> : vector<8x256xf32>
    %3 = tpu.matmul %0, %2, %cst {dimension_numbers = #tpu.dot_dimension_numbers<[1], [0], [0], [1], [0, 0, 1, 1], [], []>} : vector<8x4xf32>, vector<4x256xf32>, vector<8x256xf32> -> vector<8x256xf32>
    %c0_4 = arith.constant 0 : index
    %c0_5 = arith.constant 0 : index
    %4 = vector.load %arg3[%c0_4, %c0_5] : memref<8x1xf32, #tpu.memory_space<vmem>>, vector<8x1xf32>
    %5 = vector.broadcast %4 : vector<8x1xf32> to vector<8x256xf32>
    %6 = arith.addf %3, %5 : vector<8x256xf32>
    %cst_6 = arith.constant 0.000000e+00 : f32
    %7 = vector.broadcast %cst_6 : f32 to vector<8x256xf32>
    %8 = arith.maximumf %6, %7 : vector<8x256xf32>
    %c0_7 = arith.constant 0 : index
    %c0_8 = arith.constant 0 : index
    %c0_9 = arith.constant 0 : index
    %9 = vector.load %arg5[%c0_7, %c0_8, %c0_9] : memref<1x8x256xf32, #tpu.memory_space<vmem>>, vector<1x8x256xf32>
    %10 = vector.shape_cast %9 : vector<1x8x256xf32> to vector<8x256xf32>
    %11 = vector.shape_cast %8 : vector<8x256xf32> to vector<1x8x256xf32>
    tpu.vector_store %arg5[%c0_7, %c0_8, %c0_9], %11 {strides = array<i32>} : memref<1x8x256xf32, #tpu.memory_space<vmem>>, vector<1x8x256xf32>,
    return
  }
  func.func @transform_0(%arg0: i32, %arg1: i32) -> (i32, i32) {
    %c0_i32 = arith.constant 0 : i32
    %c0_i32_0 = arith.constant 0 : i32
    %c0_i32_1 = arith.constant 0 : i32
    return %c0_i32, %c0_i32_0 : i32, i32
  }
  func.func @transform_1(%arg0: i32, %arg1: i32) -> (i32, i32) {
    %c0_i32 = arith.constant 0 : i32
    %c0_i32_0 = arith.constant 0 : i32
    %c0_i32_1 = arith.constant 0 : i32
    return %c0_i32, %c0_i32_0 : i32, i32
  }
  func.func @transform_2(%arg0: i32, %arg1: i32) -> (i32, i32, i32) {
    %c0_i32 = arith.constant 0 : i32
    %c0_i32_0 = arith.constant 0 : i32
    return %arg0, %c0_i32, %arg1 : i32, i32, i32
  }
  func.func @transform_3(%arg0: i32, %arg1: i32) -> (i32, i32, i32) {
    %c0_i32 = arith.constant 0 : i32
    %c0_i32_0 = arith.constant 0 : i32
    return %arg0, %c0_i32, %arg1 : i32, i32, i32
  }
}

</mosaic_0001>

<llo_original>
// kernel: before_pooling_dim_reduce.1
$region0: #{before_pooling_dim_reduce.1}
  #allocation0 [shape = 'u32[]', space=smem, size = 0x4, offset = 0x4, fixed_abs, tag = 'smem constant byte address 0x4 - core index']
  #allocation1 [shape = 'u32[72,128]{1,0:T(1,128)}', space=vmem, size = 0x9000, scoped, tag = 'internal scratch']
  %s0 = inlined_call_operand.vmem [shape: f32[8,4], index: 0, kind: input, shape index: {}]
  %s1 = inlined_call_operand.vmem [shape: f32[8,1], index: 1, kind: input, shape index: {}]
  %s2 = inlined_call_operand.vmem [shape: f32[2,4,256], index: 2, kind: input, shape index: {}]
  %s3 = inlined_call_operand.vmem [shape: f32[2,8,256], index: 3, kind: output, shape index: {}]
  %s4 = sld [smem:[#allocation0]]
  $region45: #{before_pooling_dim_reduce.1} parent=0
    _
  %s6 = ssub.s32 1, %s4
  %s7 = scalar_select 0, %s6, %s4
  loop: start=0, step=1, limit=4
  $region2: #{before_pooling_dim_reduce.1} parent=0 // loop_pre_header
    _
  $region3: #{before_pooling_dim_reduce.1} parent=0 // loop_header
    %s9 = sphi 0, %s13
    %p10 = scmp.ge.s32.totalorder %s9, 4
    %s16 = sphi 0, %s28
    %s17 = sphi 0, %s24
    %s18 = sphi 0, %s16
    %s19 = sphi 0, %s17
    %s20 = sphi 0, %s18
    %s21 = sphi 0, %s19
    %s29 = sphi 0, %s29
    %s31 = sphi 0, %s29
    %s32 = sphi 0, %s31
    %s46 = sphi 0, %s32
    %s50 = sphi 0, %s50
    %s52 = sphi 0, %s50
    %s53 = sphi 0, %s52
    %s67 = sphi 0, %s53
    %s75 = sphi 0, %s77
    %s78 = sphi 0, %s75
    %s79 = sphi 0, %s78
    %s95 = sphi 0, %s79
    %s103 = sphi 0, %s105
    %s106 = sphi 0, %s103
    %s107 = sphi 0, %s106
    %s123 = sphi 0, %s107
  $region4: #{before_pooling_dim_reduce.1} parent=0 // loop_header_branch
    %12 = sbr.rel (%p10) target = $region8
  $region5: #{before_pooling_dim_reduce.1} parent=0 // loop_body
    %s14 = ssub.s32 %s9, 1
    %s15 = ssub.s32 %s9, 2
    %s22 = sadd.s32 1, %s17
    %p23 = scmp.ge.s32.totalorder %s22, 1
    %s24 = scalar_select %p23, 0, %s22
    %s25 = sadd.s32 1, %s16
    %s26 = scalar_select %p23, %s25, %s16
    %p27 = scmp.ge.s32.totalorder %s26, 2
    %s28 = scalar_select %p27, 0, %s26
    %s30 = sadd.s32 %s29, 1
    %p33 = scmp.eq.s32.totalorder %s9, 1
    %p34 = scmp.ne.s32.totalorder %s29, %s31
    %p35 = scmp.eq.s32.totalorder %s9, 0
    %p36 = por %p34, %p35
    %p37 = scmp.ne.s32.totalorder %s29, %s31
    %p38 = scmp.eq.s32.totalorder %s14, 1
    %p39 = por %p37, %p38
    %p40 = scmp.ne.s32.totalorder %s31, %s32
    %p41 = scmp.eq.s32.totalorder %s14, 0
    %p42 = por %p40, %p41
    %p43 = scmp.ne.s32.totalorder %s31, %s32
    %p44 = scmp.eq.s32.totalorder %s15, 1
    %p45 = por %p43, %p44
    %p47 = scmp.ne.s32.totalorder %s32, %s46
    %p48 = scmp.eq.s32.totalorder %s15, 0
    %p49 = por %p47, %p48
    %s51 = sadd.s32 %s50, 1
    %p54 = scmp.eq.s32.totalorder %s9, 1
    %p55 = scmp.ne.s32.totalorder %s50, %s52
    %p56 = scmp.eq.s32.totalorder %s9, 0
    %p57 = por %p55, %p56
    %p58 = scmp.ne.s32.totalorder %s50, %s52
    %p59 = scmp.eq.s32.totalorder %s14, 1
    %p60 = por %p58, %p59
    %p61 = scmp.ne.s32.totalorder %s52, %s53
    %p62 = scmp.eq.s32.totalorder %s14, 0
    %p63 = por %p61, %p62
    %p64 = scmp.ne.s32.totalorder %s52, %s53
    %p65 = scmp.eq.s32.totalorder %s15, 1
    %p66 = por %p64, %p65
    %p68 = scmp.ne.s32.totalorder %s53, %s67
    %p69 = scmp.eq.s32.totalorder %s15, 0
    %p70 = por %p68, %p69
    %s71 = ssub.s32 %s16, %s28
    %s72 = ssub.s32 %s17, %s24
    %s73 = sor.u32 %s71, %s72
    %p74 = scmp.eq.s32.totalorder %s73, 0
    %s76 = sadd.s32 %s75, 1
    %s77 = scalar_select %p74, %s75, %s76
    %p80 = pneg %p74
    %p81 = scmp.eq.s32.totalorder %s9, 1
    %p82 = por %p80, %p81
    %p83 = scmp.ne.s32.totalorder %s75, %s78
    %p84 = scmp.eq.s32.totalorder %s9, 0
    %p85 = por %p83, %p84
    %p86 = scmp.ne.s32.totalorder %s75, %s78
    %p87 = scmp.eq.s32.totalorder %s14, 1
    %p88 = por %p86, %p87
    %p89 = scmp.ne.s32.totalorder %s78, %s79
    %p90 = scmp.eq.s32.totalorder %s14, 0
    %p91 = por %p89, %p90
    %p92 = scmp.ne.s32.totalorder %s78, %s79
    %p93 = scmp.eq.s32.totalorder %s15, 1
    %p94 = por %p92, %p93
    %p96 = scmp.ne.s32.totalorder %s79, %s95
    %p97 = scmp.eq.s32.totalorder %s15, 0
    %p98 = por %p96, %p97
    %s99 = ssub.s32 %s16, %s28
    %s100 = ssub.s32 %s17, %s24
    %s101 = sor.u32 %s99, %s100
    %p102 = scmp.eq.s32.totalorder %s101, 0
    %s104 = sadd.s32 %s103, 1
    %s105 = scalar_select %p102, %s103, %s104
    %p108 = pneg %p102
    %p109 = scmp.eq.s32.totalorder %s9, 1
    %p110 = por %p108, %p109
    %p111 = scmp.ne.s32.totalorder %s103, %s106
    %p112 = scmp.eq.s32.totalorder %s9, 0
    %p113 = por %p111, %p112
    %p114 = scmp.ne.s32.totalorder %s103, %s106
    %p115 = scmp.eq.s32.totalorder %s14, 1
    %p116 = por %p114, %p115
    %p117 = scmp.ne.s32.totalorder %s106, %s107
    %p118 = scmp.eq.s32.totalorder %s14, 0
    %p119 = por %p117, %p118
    %p120 = scmp.ne.s32.totalorder %s106, %s107
    %p121 = scmp.eq.s32.totalorder %s15, 1
    %p122 = por %p120, %p121
    %p124 = scmp.ne.s32.totalorder %s107, %s123
    %p125 = scmp.eq.s32.totalorder %s15, 0
    %p126 = por %p124, %p125
    %p127 = scmp.le.s32.totalorder 1, %s9
    %p128 = scmp.lt.s32.totalorder %s9, 3
    %p129 = pnand %p127, %p128
    %p130 = pneg %p129
    // Predicated region
    $region9: #{before_pooling_dim_reduce.1} parent=5 // pred_check
      _
    $region10: #{before_pooling_dim_reduce.1} parent=5 // pred_check_branch
      %132 = sbr.rel (%p129) target = $region12
    $region11: #{before_pooling_dim_reduce.1} parent=5 // pred_region
      %s133 = ssub.s32 %s9, 1
      // Predicated region
      $region13: #{before_pooling_dim_reduce.1} parent=11 // pred_check
        %p134 = pneg %p42
      $region14: #{before_pooling_dim_reduce.1} parent=11 // pred_check_branch
        %136 = sbr.rel (%p134) target = $region16
      $region15: #{before_pooling_dim_reduce.1} parent=11 // pred_region
        _
      $region16: #{before_pooling_dim_reduce.1} parent=11 // pred_fallthru
        _
      // Predicated region
      $region17: #{before_pooling_dim_reduce.1} parent=11 // pred_check
        %p137 = pneg %p63
      $region18: #{before_pooling_dim_reduce.1} parent=11 // pred_check_branch
        %139 = sbr.rel (%p137) target = $region20
      $region19: #{before_pooling_dim_reduce.1} parent=11 // pred_region
        _
      $region20: #{before_pooling_dim_reduce.1} parent=11 // pred_fallthru
        _
    $region12: #{before_pooling_dim_reduce.1} parent=5 // pred_fallthru
      _
    %p140 = scmp.lt.s32.totalorder %s9, 2
    // Predicated region
    $region21: #{before_pooling_dim_reduce.1} parent=5 // pred_check
      %p141 = pneg %p140
    $region22: #{before_pooling_dim_reduce.1} parent=5 // pred_check_branch
      %143 = sbr.rel (%p141) target = $region24
    $region23: #{before_pooling_dim_reduce.1} parent=5 // pred_region
      // Predicated region
      $region25: #{before_pooling_dim_reduce.1} parent=23 // pred_check
        %p144 = pneg %p85
      $region26: #{before_pooling_dim_reduce.1} parent=23 // pred_check_branch
        %146 = sbr.rel (%p144) target = $region28
      $region27: #{before_pooling_dim_reduce.1} parent=23 // pred_region
        %s147 = smul.u32 2, %s17
        %p148 = scmp.lt.s32.totalorder %s16, 1
        %s149 = scalar_select %p148, %s16, 1
        %p150 = scmp.lt.s32.totalorder %s147, 1
        %s151 = scalar_select %p150, %s147, 1
        %s152 = smul.addr %s149, 2
        %s153 = sadd.s32 %s151, %s152
        %s154 = smul.addr %s153, 4
        %s155 = scalar_lea.vmem %s2, %s154
        %s156 = smul.u32 2, %s17
      $region28: #{before_pooling_dim_reduce.1} parent=23 // pred_fallthru
        _
    $region24: #{before_pooling_dim_reduce.1} parent=5 // pred_fallthru
      _
    %p157 = scmp.le.s32.totalorder 1, %s9
    %p158 = scmp.lt.s32.totalorder %s9, 3
    %p159 = pnand %p157, %p158
    %p160 = pneg %p159
    // Predicated region
    $region29: #{before_pooling_dim_reduce.1} parent=5 // pred_check
      _
    $region30: #{before_pooling_dim_reduce.1} parent=5 // pred_check_branch
      %162 = sbr.rel (%p159) target = $region32
    $region31: #{before_pooling_dim_reduce.1} parent=5 // pred_region
      %s163 = ssub.s32 %s9, 1
      %p164 = pneg %p42
      %p165 = pneg %p39
      %p166 = pneg %p63
      %p167 = pneg %p60
      %s168 = smul.u32 2, %s19
      %p169 = scmp.lt.s32.totalorder %s18, 1
      %s170 = scalar_select %p169, %s18, 1
      %p171 = scmp.lt.s32.totalorder %s168, 1
      %s172 = scalar_select %p171, %s168, 1
      %s173 = smul.addr %s170, 2
      %s174 = sadd.s32 %s172, %s173
      %s175 = smul.addr %s174, 4
      %s176 = scalar_lea.vmem %s2, %s175
      %p177 = pneg %p91
      %p178 = pneg %p88
      %p179 = pneg %p119
      %p180 = pneg %p116
      %s181 = smul.u32 2, %s19
      %p182 = scmp.lt.s32.totalorder %s18, 1
      %s183 = scalar_select %p182, %s18, 1
      %p184 = scmp.lt.s32.totalorder %s181, 1
      %s185 = scalar_select %p184, %s181, 1
      %s186 = smul.addr %s183, 2
      %s187 = sadd.s32 %s185, %s186
      %s188 = smul.addr %s187, 8
      %s189 = scalar_lea.vmem %s3, %s188
      %s190 = smul.u32 2, %s19
      %p191 = scmp.lt.s32.totalorder %s18, 1
      %s192 = scalar_select %p191, %s18, 1
      %p193 = scmp.lt.s32.totalorder %s190, 1
      %s194 = scalar_select %p193, %s190, 1
      %s195 = smul.addr %s192, 2
      %s196 = sadd.s32 %s194, %s195
      %s197 = smul.addr %s196, 4
      %s198 = scalar_lea.vmem %s2, %s197
      %s199 = smul.u32 2, %s19
      %s200 = smul.u32 2, %s19
      %p201 = scmp.lt.s32.totalorder %s18, 1
      %s202 = scalar_select %p201, %s18, 1
      %p203 = scmp.lt.s32.totalorder %s200, 1
      %s204 = scalar_select %p203, %s200, 1
      %s205 = smul.addr %s202, 2
      %s206 = sadd.s32 %s204, %s205
      %s207 = smul.addr %s206, 8
      %s208 = scalar_lea.vmem %s3, %s207
      %s209 = smul.u32 2, %s19
      %v210 = vld [vmem:[%s0] sm:$0xff]
      %v211 = vld [vmem:[%s198] sm:$0xff]
      %v212 = vld [vmem:[%s1] sm:$0xff]
      %214 = vset.pattern.permute.xlu0 0
      %215 = vperm.xlu0 %214, %v212
      %v216 = vpop.permute.xlu0 %215
      %219 = vst [vmem:[#allocation1] ss:$2 sm:$0xff] %v211
      %v220 = vld.sshfl [vmem:[#allocation1] sm:$0xff pattern:$0x75316420]
      %v221 = vld.sshfl [vmem:[#allocation1 + $0x8] sm:$0xff pattern:$0x75316420]
      %vm222 = vcmask 31744
      %v224 = vsel %vm222, %v210, 0
      %vm226 = vcmask 1043456
      %v227 = vsel %vm226, %v220, 0
      %v229 = vsel %vm226, %v221, 0
      %231 = vmatpush.msra.mxu0 0.0
      %232 = vmatpush.msra.mxu0 0.0
      %233 = vmatpush.msra.mxu0 0.0
      %234 = vmatpush.msra.mxu0 0.0
      %235 = vmatpush.msra.mxu0 0.0
      %236 = vmatpush.msra.mxu0 0.0
      %237 = vmatpush.msra.mxu0 0.0
      %238 = vmatpush.msra.mxu0 0.0
      %239 = vmatpush.msra.mxu0 0.0
      %240 = vmatpush.msra.mxu0 0.0
      %241 = vmatpush.msra.mxu0 0.0
      %242 = vmatpush.msra.mxu0 0.0
      %243 = vmatpush.msra.mxu0 0.0
      %244 = vmatpush.msra.mxu0 0.0
      %245 = vmatpush.msra.mxu0 0.0
      %246 = vmatpush.msra.mxu0 %v227
      %247 = vmatmul.f32.gmra.mxu0 %v224
      %v248 = vpop.f32.mrf.mxu0
      %v249 = vadd.f32 %v216, %v248
      %250 = vdwg.mxu0
      %251 = vmatpush.msra.mxu0 0.0
      %252 = vmatpush.msra.mxu0 0.0
      %253 = vmatpush.msra.mxu0 0.0
      %254 = vmatpush.msra.mxu0 0.0
      %255 = vmatpush.msra.mxu0 0.0
      %256 = vmatpush.msra.mxu0 0.0
      %257 = vmatpush.msra.mxu0 0.0
      %258 = vmatpush.msra.mxu0 0.0
      %259 = vmatpush.msra.mxu0 0.0
      %260 = vmatpush.msra.mxu0 0.0
      %261 = vmatpush.msra.mxu0 0.0
      %262 = vmatpush.msra.mxu0 0.0
      %263 = vmatpush.msra.mxu0 0.0
      %264 = vmatpush.msra.mxu0 0.0
      %265 = vmatpush.msra.mxu0 0.0
      %266 = vmatpush.msra.mxu0 %v229
      %267 = vmatmul.f32.gmra.mxu0 %v224
      %v268 = vpop.f32.mrf.mxu0
      %v269 = vadd.f32 %v216, %v268
      %270 = vdwg.mxu0
      %v271 = vmax.f32 %v249, 0.0
      %v272 = vmax.f32 %v269, 0.0
      %273 = vst [vmem:[%s208] sm:$0xff] %v271
      %274 = vst [vmem:[%s208 + $0x8] sm:$0xff] %v272
      %s275 = smul.u32 2, %s19
      %p276 = scmp.lt.s32.totalorder %s18, 1
      %s277 = scalar_select %p276, %s18, 1
      %p278 = scmp.lt.s32.totalorder %s275, 1
      %s279 = scalar_select %p278, %s275, 1
      %s280 = smul.addr %s277, 2
      %s281 = sadd.s32 %s279, %s280
      %s282 = smul.addr %s281, 8
      %s283 = scalar_lea.vmem %s3, %s282
      // Predicated region
      $region33: #{before_pooling_dim_reduce.1} parent=31 // pred_check
        %p284 = pneg %p116
      $region34: #{before_pooling_dim_reduce.1} parent=31 // pred_check_branch
        %286 = sbr.rel (%p284) target = $region36
      $region35: #{before_pooling_dim_reduce.1} parent=31 // pred_region
        %s287 = smul.u32 2, %s19
      $region36: #{before_pooling_dim_reduce.1} parent=31 // pred_fallthru
        _
    $region32: #{before_pooling_dim_reduce.1} parent=5 // pred_fallthru
      _
    %p288 = scmp.le.s32.totalorder 2, %s9
    // Predicated region
    $region37: #{before_pooling_dim_reduce.1} parent=5 // pred_check
      %p289 = pneg %p288
    $region38: #{before_pooling_dim_reduce.1} parent=5 // pred_check_branch
      %291 = sbr.rel (%p289) target = $region40
    $region39: #{before_pooling_dim_reduce.1} parent=5 // pred_region
      %s292 = ssub.s32 %s9, 2
      // Predicated region
      $region41: #{before_pooling_dim_reduce.1} parent=39 // pred_check
        %p293 = pneg %p122
      $region42: #{before_pooling_dim_reduce.1} parent=39 // pred_check_branch
        %295 = sbr.rel (%p293) target = $region44
      $region43: #{before_pooling_dim_reduce.1} parent=39 // pred_region
        %s296 = smul.u32 2, %s21
        %p297 = scmp.lt.s32.totalorder %s20, 1
        %s298 = scalar_select %p297, %s20, 1
        %p299 = scmp.lt.s32.totalorder %s296, 1
        %s300 = scalar_select %p299, %s296, 1
        %s301 = smul.addr %s298, 2
        %s302 = sadd.s32 %s300, %s301
        %s303 = smul.addr %s302, 8
        %s304 = scalar_lea.vmem %s3, %s303
      $region44: #{before_pooling_dim_reduce.1} parent=39 // pred_fallthru
        _
    $region40: #{before_pooling_dim_reduce.1} parent=5 // pred_fallthru
      _
  $region6: #{before_pooling_dim_reduce.1} parent=0 // loop_footer
    %s13 = sadd.s32 1, %s9
  $region7: #{before_pooling_dim_reduce.1} parent=0 // loop_footer_branch
    %8 = sbr.rel target = $region3
  $region8: #{before_pooling_dim_reduce.1} parent=0 // loop_exit
    _

</llo_original>
